<compile_context>
chip_gen: v7x
topology: tpu7x:2x2x1
jax: 0.10.0
libtpu: 0.0.40
codegen_flags: <defaults>
</compile_context>

<pallas_src>
import jax
import jax.numpy as jnp
import numpy as np
from jax.experimental import pallas as pl
from jax.experimental.pallas import tpu as pltpu


def _round_up(x, m):
    return ((x + m - 1) // m) * m


def _silu(x):
    # exp goes to the EUP; division kept exact so the tight reference tolerance
    # holds (approx reciprocal evaluated but rejected for accuracy).
    return x * (1.0 / (1.0 + jnp.exp(-x)))


# ----------------------------- embedding kernel ------------------------------


def _make_embed_kernel(n_views):
    nv1 = n_views + 1

    def kernel(x_ref, wfirst_ref, w1_ref, b1s_ref, w2_ref, b2_ref,
               z_ref, an_ref, zsn_ref):
        tb = x_ref.shape[0]
        hp = w1_ref.shape[0]
        lp = w2_ref.shape[1]

        # ---- first layer: ONE matmul covering every per-view mapping
        # (block-diagonal column blocks) and the fused aux/multi joint path
        # (dense last column block).
        u = jnp.dot(x_ref[...], wfirst_ref[...],
                    preferred_element_type=jnp.float32)          # (TB, nv1*Hp)

        # ---- restack the nv1 pre-activations along sublanes -> phi runs ONCE.
        h = jnp.concatenate([u[:, v * hp:(v + 1) * hp] for v in range(nv1)],
                            axis=0)                              # (nv1*TB, Hp)
        b1full = jnp.concatenate(
            [jnp.broadcast_to(b1s_ref[v:v + 1, :], (tb, hp)) for v in range(nv1)],
            axis=0)                                              # fused per-branch bias
        a = _silu(jnp.dot(h, w1_ref[...], preferred_element_type=jnp.float32)
                  + b1full)
        out = jnp.dot(a, w2_ref[...], preferred_element_type=jnp.float32)
        out = out + jnp.broadcast_to(b2_ref[...], (nv1 * tb, lp))

        # ---- row-L2 normalized copies for the contrastive loss.
        ss = jnp.sum(out * out, axis=1, keepdims=True)
        outn = out * jax.lax.rsqrt(jnp.maximum(ss, 1e-24))

        for v in range(n_views):
            zsn_ref[v, :, :] = outn[v * tb:(v + 1) * tb, :]
        z_ref[...] = out[n_views * tb:, :]
        an_ref[...] = outn[n_views * tb:, :]

    return kernel


def gmc_embed(xs, map_ws, map_bs, aux_ws, aux_bs, wmm, bmm, w1, b1, w2, b2,
              *, block_b=512):
    """Fused embedder.  Weights are [in, out] (transposed vs torch), biases [1, out].

    Returns (z_raw, z_norm, Z_norm); latent columns >= latent_dim are exact
    zeros (lane padding); batch is padded up to a multiple of the batch tile.
    """
    n_views = len(xs)
    B = xs[0].shape[0]
    H = w1.shape[0]
    L = w2.shape[1]
    Hp = _round_up(H, 128)
    Lp = _round_up(L, 128)
    nv1 = n_views + 1
    f32 = jnp.float32

    # ---- algebraic pre-fusion of aux_maps + multi_map (exact):
    #   cat_v(X_v Wa_v + ba_v) Wmm + bmm == sum_v X_v (Wa_v Wmm_v) + bj
    wj = []
    bj = jnp.reshape(bmm, (1, H)).astype(f32)
    for v in range(n_views):
        wmm_v = wmm[v * H:(v + 1) * H, :].astype(f32)
        wj.append(aux_ws[v].astype(f32) @ wmm_v)
        bj = bj + jnp.reshape(aux_bs[v], (1, H)).astype(f32) @ wmm_v

    # ---- fold per-branch pre-activation biases into phi's first-layer bias:
    #   (h + b) @ W1 + b1 == h @ W1 + (b1 + b @ W1)
    w1f = w1.astype(f32)
    b1row = jnp.reshape(b1, (1, H)).astype(f32)
    b1s = [b1row + jnp.reshape(map_bs[v], (1, H)).astype(f32) @ w1f
           for v in range(n_views)]
    b1s.append(b1row + bj @ w1f)
    b1s_p = jnp.pad(jnp.concatenate(b1s, axis=0), ((0, 0), (0, Hp - H)))  # (nv1, Hp)

    # ---- lane-aligned packing of the inputs and the single first-layer weight.
    dvs = [int(x.shape[1]) for x in xs]
    dps = [_round_up(d, 128) for d in dvs]
    offs = np.concatenate([[0], np.cumsum(dps)]).astype(int)
    Dsum_p = int(offs[-1])

    wfirst = jnp.zeros((Dsum_p, nv1 * Hp), f32)
    for v in range(n_views):
        r0 = int(offs[v])
        wfirst = wfirst.at[r0:r0 + dvs[v], v * Hp:v * Hp + H].set(
            map_ws[v].astype(f32))
        wfirst = wfirst.at[r0:r0 + dvs[v], n_views * Hp:n_views * Hp + H].set(wj[v])

    w1_p = jnp.pad(w1f, ((0, Hp - H), (0, Hp - H)))
    w2_p = jnp.pad(w2.astype(f32), ((0, Hp - H), (0, Lp - L)))
    b2_p = jnp.pad(jnp.reshape(b2, (1, L)).astype(f32), ((0, 0), (0, Lp - L)))

    # ---- batch tile derived from the working set (keeps v7x's 64 MiB safe)
    # and split so the "parallel" axis has >= 2 steps when the batch allows.
    weight_bytes = 4 * int(wfirst.size + w1_p.size + w2_p.size
                           + b1s_p.size + b2_p.size)
    per_row_bytes = 4 * (2 * (Dsum_p + (n_views + 2) * Lp) + nv1 * (3 * Hp + 2 * Lp))
    budget = 40 * 1024 * 1024
    tb_cap = max(8, ((budget - 2 * weight_bytes) // per_row_bytes) // 8 * 8)

    B8 = _round_up(B, 8)
    TB = max(8, min(block_b, B8, tb_cap))
    if B8 // TB < 2 and B8 >= 16:
        TB = max(8, _round_up((B8 + 1) // 2, 8))
    B_pad = _round_up(B, TB)
    grid = (B_pad // TB,)

    xcat = jnp.zeros((B_pad, Dsum_p), f32)
    for v in range(n_views):
        r0 = int(offs[v])
        xcat = xcat.at[:B, r0:r0 + dvs[v]].set(xs[v].astype(f32))

    # grid-invariant operands: constant index_map -> Mosaic fetches them once.
    def const_spec(a):
        return pl.BlockSpec(a.shape, lambda i: (0,) * a.ndim)

    in_specs = [pl.BlockSpec((TB, Dsum_p), lambda i: (i, 0)),
                const_spec(wfirst), const_spec(w1_p), const_spec(b1s_p),
                const_spec(w2_p), const_spec(b2_p)]
    out_shape = (jax.ShapeDtypeStruct((B_pad, Lp), f32),            # raw joint z
                 jax.ShapeDtypeStruct((B_pad, Lp), f32),            # normalized z
                 jax.ShapeDtypeStruct((n_views, B_pad, Lp), f32))   # normalized Z
    out_specs = (pl.BlockSpec((TB, Lp), lambda i: (i, 0)),
                 pl.BlockSpec((TB, Lp), lambda i: (i, 0)),
                 pl.BlockSpec((n_views, TB, Lp), lambda i: (0, i, 0)))

    flops = int(2 * B_pad * (Dsum_p * nv1 * Hp + nv1 * Hp * Hp + nv1 * Hp * Lp))
    transcendentals = int(B_pad * nv1 * Hp)
    bytes_accessed = int(4 * (B_pad * Dsum_p + B_pad * Lp * (n_views + 2))
                         + weight_bytes)

    z_raw, z_n, zs_n = pl.pallas_call(
        _make_embed_kernel(n_views),
        grid=grid,
        in_specs=in_specs,
        out_specs=out_specs,
        out_shape=out_shape,
        compiler_params=pltpu.CompilerParams(
            dimension_semantics=("parallel",),
            vmem_limit_bytes=48 * 1024 * 1024),
        cost_estimate=pl.CostEstimate(flops=flops,
                                      transcendentals=transcendentals,
                                      bytes_accessed=bytes_accessed),
    )(xcat, wfirst, w1_p, b1s_p, w2_p, b2_p)
    return z_raw, z_n, zs_n


# -------------------------------- loss kernel --------------------------------


def _make_loss_kernel(n_views, inv_tau, batch, tq):
    def kernel(aq_ref, zq_ref, akT_ref, zkT_ref, loss_ref):
        i = pl.program_id(0)

        @pl.when(i == 0)
        def _init():
            loss_ref[...] = jnp.zeros_like(loss_ref)

        bk = akT_ref.shape[1]
        col = jax.lax.broadcasted_iota(jnp.int32, (tq, bk), 1)
        rowg = jax.lax.broadcasted_iota(jnp.int32, (tq, bk), 0) + i * tq
        diag_m = col == rowg
        col_ok = (col < batch).astype(jnp.float32)     # mask padded key columns
        row_ok = rowg[:, :1] < batch                   # mask padded query rows

        # temperature folded into the (small) query blocks: one multiply on
        # (TQ, Lp) instead of divides on every (TQ, B) similarity matrix.
        aq = aq_ref[...] * inv_tau
        joint = jnp.exp(jnp.dot(aq, akT_ref[...],
                                preferred_element_type=jnp.float32)) * col_ok
        joint_row = jnp.sum(joint, axis=1, keepdims=True)
        joint_diag = jnp.sum(jnp.where(diag_m, joint, 0.0), axis=1, keepdims=True)

        acc = jnp.zeros((1, 1), jnp.float32)
        for v in range(n_views):
            zkT = zkT_ref[v, :, :]
            zq = zq_ref[v, :, :] * inv_tau
            pos = jnp.exp(jnp.dot(aq, zkT,
                                  preferred_element_type=jnp.float32)) * col_ok
            slf = jnp.exp(jnp.dot(zq, zkT,
                                  preferred_element_type=jnp.float32)) * col_ok
            pos_diag = jnp.sum(jnp.where(diag_m, pos, 0.0), axis=1, keepdims=True)
            slf_diag = jnp.sum(jnp.where(diag_m, slf, 0.0), axis=1, keepdims=True)
            # neg_sum = rowsum(self + pos + joint) - its diagonal (no eye mask).
            neg = (jnp.sum(pos, axis=1, keepdims=True)
                   + jnp.sum(slf, axis=1, keepdims=True)
                   + joint_row) - (pos_diag + slf_diag + joint_diag)
            per_row = jnp.where(row_ok, jnp.log(neg) - jnp.log(pos_diag), 0.0)
            acc = acc + jnp.sum(per_row, axis=0, keepdims=True)

        loss_ref[...] += acc

        @pl.when(i == pl.num_programs(0) - 1)
        def _finish():
            loss_ref[...] = loss_ref[...] * (1.0 / (n_views * batch))

    return kernel


def gmc_loss(z_n, zs_n, tau, batch):
    """GMC contrastive loss over pre-normalized embeddings, tiled over query rows."""
    n_views = zs_n.shape[0]
    B_pad, Lp = z_n.shape

    tq = 8
    for cand in (512, 256, 128, 64, 32, 16, 8):
        if B_pad % cand == 0:
            tq = cand
            break
    grid = (B_pad // tq,)

    # Keys transposed once here (XLA), so the kernel issues plain
    # (TQ,Lp)x(Lp,B) matmuls without per-step XLU transposes.
    akT = jnp.transpose(z_n)                  # (Lp, B_pad)
    zkT = jnp.transpose(zs_n, (0, 2, 1))      # (n_views, Lp, B_pad)

    # TODO(synk): for very large contrastive batches the key axis (full B
    # resident here) would also need tiling; only the query axis is tiled.
    loss = pl.pallas_call(
        _make_loss_kernel(n_views, float(1.0 / tau), int(batch), tq),
        grid=grid,
        in_specs=[pl.BlockSpec((tq, Lp), lambda i: (i, 0)),
                  pl.BlockSpec((n_views, tq, Lp), lambda i: (0, i, 0)),
                  pl.BlockSpec(akT.shape, lambda i: (0, 0)),
                  pl.BlockSpec(zkT.shape, lambda i: (0, 0, 0))],
        out_specs=pl.BlockSpec((1, 1), lambda i: (0, 0)),
        out_shape=jax.ShapeDtypeStruct((1, 1), jnp.float32),
        compiler_params=pltpu.CompilerParams(
            dimension_semantics=("arbitrary",)),
    )(z_n, zs_n, akT, zkT)
    return loss[0, 0]


# ---------------------------------- forward ----------------------------------


def gmc_forward(xs, map_ws, map_bs, aux_ws, aux_bs, wmm, bmm,
                w1, b1, w2, b2, tau, *, block_b=512, calc_loss=True):
    B = xs[0].shape[0]
    L = w2.shape[1]
    z_raw, z_n, zs_n = gmc_embed(xs, map_ws, map_bs, aux_ws, aux_bs, wmm, bmm,
                                 w1, b1, w2, b2, block_b=block_b)
    loss = gmc_loss(z_n, zs_n, tau, B) if calc_loss else None
    return z_raw[:B, :L], loss


# ----------------------------- pure-JAX reference ----------------------------


def gmc_reference(xs, map_ws, map_bs, aux_ws, aux_bs, wmm, bmm,
                  w1, b1, w2, b2, tau):
    def phi(h):
        return _silu(h @ w1 + b1) @ w2 + b2

    def normalize(x):
        nrm = jnp.sqrt(jnp.sum(x * x, axis=1, keepdims=True))
        return x / jnp.maximum(nrm, 1e-12)

    def sim(x, y):
        return (normalize(x) @ normalize(y).T) / tau

    H = [x @ w + b for x, w, b in zip(xs, map_ws, map_bs)]
    Z = [phi(h) for h in H]
    Ha = [x @ w + b for x, w, b in zip(xs, aux_ws, aux_bs)]
    joint = jnp.concatenate(Ha, axis=1) @ wmm + bmm
    a = phi(joint)

    B = a.shape[0]
    eye = jnp.eye(B, dtype=jnp.float32)
    joint_sim = jnp.exp(sim(a, a))
    loss = 0.0
    for z in Z:
        pos = jnp.exp(sim(a, z))
        neg = (jnp.exp(sim(z, z)) + pos + joint_sim) * (1.0 - eye)
        loss = loss + jnp.mean(-jnp.log(jnp.diag(pos) / jnp.sum(neg, axis=1)))
    loss = loss / len(Z)
    return a, loss


if __name__ == "__main__":
    key = jax.random.PRNGKey(0)

    batch = 8
    view_dims = [16, 24]
    hidden_dim = 32
    latent_dim = 32
    tau = 0.1
    n_views = len(view_dims)

    keys = iter(jax.random.split(key, 32))

    xs = [jax.random.normal(next(keys), (batch, d), jnp.float32) for d in view_dims]

    map_ws = [0.1 * jax.random.normal(next(keys), (d, hidden_dim), jnp.float32)
              for d in view_dims]
    map_bs = [0.1 * jax.random.normal(next(keys), (1, hidden_dim), jnp.float32)
              for _ in view_dims]
    aux_ws = [0.1 * jax.random.normal(next(keys), (d, hidden_dim), jnp.float32)
              for d in view_dims]
    aux_bs = [0.1 * jax.random.normal(next(keys), (1, hidden_dim), jnp.float32)
              for _ in view_dims]
    wmm = 0.1 * jax.random.normal(next(keys), (n_views * hidden_dim, hidden_dim),
                                  jnp.float32)
    bmm = 0.1 * jax.random.normal(next(keys), (1, hidden_dim), jnp.float32)
    w1 = 0.1 * jax.random.normal(next(keys), (hidden_dim, hidden_dim), jnp.float32)
    b1 = 0.1 * jax.random.normal(next(keys), (1, hidden_dim), jnp.float32)
    w2 = 0.1 * jax.random.normal(next(keys), (hidden_dim, latent_dim), jnp.float32)
    b2 = 0.1 * jax.random.normal(next(keys), (1, latent_dim), jnp.float32)

    z, loss = gmc_forward(xs, map_ws, map_bs, aux_ws, aux_bs, wmm, bmm,
                          w1, b1, w2, b2, tau)
    z = jax.block_until_ready(z)
    loss = jax.block_until_ready(loss)

    z_ref, loss_ref = gmc_reference(xs, map_ws, map_bs, aux_ws, aux_bs, wmm, bmm,
                                    w1, b1, w2, b2, tau)

    np.testing.assert_allclose(np.asarray(z), np.asarray(z_ref),
                               rtol=2e-4, atol=2e-4)
    np.testing.assert_allclose(np.asarray(loss), np.asarray(loss_ref),
                               rtol=2e-4, atol=2e-4)

    print("KERNEL_OK")
</pallas_src>

<mosaic_0001>
module attributes {stable_mosaic.version = 11 : i64} {
  func.func @kernel(%arg0: i32, %arg1: memref<8x256xf32, #tpu.memory_space<vmem>>, %arg2: memref<256x384xf32, #tpu.memory_space<vmem>>, %arg3: memref<128x128xf32, #tpu.memory_space<vmem>>, %arg4: memref<3x128xf32, #tpu.memory_space<vmem>>, %arg5: memref<128x128xf32, #tpu.memory_space<vmem>>, %arg6: memref<1x128xf32, #tpu.memory_space<vmem>>, %arg7: memref<8x128xf32, #tpu.memory_space<vmem>>, %arg8: memref<8x128xf32, #tpu.memory_space<vmem>>, %arg9: memref<2x8x128xf32, #tpu.memory_space<vmem>>) attributes {dimension_semantics = [#tpu.dimension_semantics<parallel>], iteration_bounds = array<i64: 1>, scalar_prefetch = 0 : i64, scratch_operands = 0 : i64, tpu.core_type = #tpu.core_type<tc>, window_params = [{transform_indices = @transform_0, window_bounds = array<i64: 8, 256>}, {pipeline_mode = #tpu.pipeline_mode<synchronous>, transform_indices = @transform_1, window_bounds = array<i64: 256, 384>}, {pipeline_mode = #tpu.pipeline_mode<synchronous>, transform_indices = @transform_2, window_bounds = array<i64: 128, 128>}, {pipeline_mode = #tpu.pipeline_mode<synchronous>, transform_indices = @transform_3, window_bounds = array<i64: 3, 128>}, {pipeline_mode = #tpu.pipeline_mode<synchronous>, transform_indices = @transform_4, window_bounds = array<i64: 128, 128>}, {pipeline_mode = #tpu.pipeline_mode<synchronous>, transform_indices = @transform_5, window_bounds = array<i64: 1, 128>}, {transform_indices = @transform_6, window_bounds = array<i64: 8, 128>}, {transform_indices = @transform_7, window_bounds = array<i64: 8, 128>}, {transform_indices = @transform_8, window_bounds = array<i64: 2, 8, 128>}]} {
    %c0 = arith.constant 0 : index
    %c0_0 = arith.constant 0 : index
    %0 = vector.load %arg1[%c0, %c0_0] : memref<8x256xf32, #tpu.memory_space<vmem>>, vector<8x256xf32>
    %c0_1 = arith.constant 0 : index
    %c0_2 = arith.constant 0 : index
    %1 = vector.load %arg2[%c0_1, %c0_2] : memref<256x384xf32, #tpu.memory_space<vmem>>, vector<256x384xf32>
    %cst = arith.constant dense<0.000000e+00> : vector<8x384xf32>
    %2 = tpu.matmul %0, %1, %cst {dimension_numbers = #tpu.dot_dimension_numbers<[1], [0], [0], [1], [0, 0, 1, 1], [], []>} : vector<8x256xf32>, vector<256x384xf32>, vector<8x384xf32> -> vector<8x384xf32>
    %3 = vector.extract_strided_slice %2 {offsets = [0, 0], sizes = [8, 128], strides = [1, 1]} : vector<8x384xf32> to vector<8x128xf32>
    %4 = vector.extract_strided_slice %2 {offsets = [0, 128], sizes = [8, 128], strides = [1, 1]} : vector<8x384xf32> to vector<8x128xf32>
    %5 = vector.extract_strided_slice %2 {offsets = [0, 256], sizes = [8, 128], strides = [1, 1]} : vector<8x384xf32> to vector<8x128xf32>
    %6 = tpu.concatenate %3, %4, %5 in 0 : vector<8x128xf32>, vector<8x128xf32>, vector<8x128xf32> -> vector<24x128xf32>
    %c0_3 = arith.constant 0 : index
    %c0_4 = arith.constant 0 : index
    %7 = vector.load %arg4[%c0_3, %c0_4] : memref<3x128xf32, #tpu.memory_space<vmem>>, vector<1x128xf32>
    %8 = vector.shape_cast %7 : vector<1x128xf32> to vector<1x128xf32>
    %9 = vector.broadcast %8 : vector<1x128xf32> to vector<8x128xf32>
    %c1 = arith.constant 1 : index
    %c0_5 = arith.constant 0 : index
    %10 = vector.load %arg4[%c1, %c0_5] : memref<3x128xf32, #tpu.memory_space<vmem>>, vector<1x128xf32>
    %11 = vector.shape_cast %10 : vector<1x128xf32> to vector<1x128xf32>
    %12 = vector.broadcast %11 : vector<1x128xf32> to vector<8x128xf32>
    %c2 = arith.constant 2 : index
    %c0_6 = arith.constant 0 : index
    %13 = vector.load %arg4[%c2, %c0_6] : memref<3x128xf32, #tpu.memory_space<vmem>>, vector<1x128xf32>
    %14 = vector.shape_cast %13 : vector<1x128xf32> to vector<1x128xf32>
    %15 = vector.broadcast %14 : vector<1x128xf32> to vector<8x128xf32>
    %16 = tpu.concatenate %9, %12, %15 in 0 : vector<8x128xf32>, vector<8x128xf32>, vector<8x128xf32> -> vector<24x128xf32>
    %c0_7 = arith.constant 0 : index
    %c0_8 = arith.constant 0 : index
    %17 = vector.load %arg3[%c0_7, %c0_8] : memref<128x128xf32, #tpu.memory_space<vmem>>, vector<128x128xf32>
    %cst_9 = arith.constant dense<0.000000e+00> : vector<24x128xf32>
    %18 = tpu.matmul %6, %17, %cst_9 {dimension_numbers = #tpu.dot_dimension_numbers<[1], [0], [0], [1], [0, 0, 1, 1], [], []>} : vector<24x128xf32>, vector<128x128xf32>, vector<24x128xf32> -> vector<24x128xf32>
    %19 = arith.addf %18, %16 : vector<24x128xf32>
    %cst_10 = arith.constant 0.000000e+00 : f32
    %20 = vector.broadcast %cst_10 : f32 to vector<24x128xf32>
    %21 = arith.subf %20, %19 : vector<24x128xf32>
    %22 = math.exp %21 : vector<24x128xf32>
    %cst_11 = arith.constant 1.000000e+00 : f32
    %23 = vector.broadcast %cst_11 : f32 to vector<24x128xf32>
    %24 = arith.addf %23, %22 : vector<24x128xf32>
    %cst_12 = arith.constant 1.000000e+00 : f32
    %25 = vector.broadcast %cst_12 : f32 to vector<24x128xf32>
    %26 = arith.divf %25, %24 : vector<24x128xf32>
    %27 = arith.mulf %19, %26 : vector<24x128xf32>
    %c0_13 = arith.constant 0 : index
    %c0_14 = arith.constant 0 : index
    %28 = vector.load %arg5[%c0_13, %c0_14] : memref<128x128xf32, #tpu.memory_space<vmem>>, vector<128x128xf32>
    %cst_15 = arith.constant dense<0.000000e+00> : vector<24x128xf32>
    %29 = tpu.matmul %27, %28, %cst_15 {dimension_numbers = #tpu.dot_dimension_numbers<[1], [0], [0], [1], [0, 0, 1, 1], [], []>} : vector<24x128xf32>, vector<128x128xf32>, vector<24x128xf32> -> vector<24x128xf32>
    %c0_16 = arith.constant 0 : index
    %c0_17 = arith.constant 0 : index
    %30 = vector.load %arg6[%c0_16, %c0_17] : memref<1x128xf32, #tpu.memory_space<vmem>>, vector<1x128xf32>
    %31 = vector.shape_cast %30 : vector<1x128xf32> to vector<1x128xf32>
    %32 = vector.broadcast %31 : vector<1x128xf32> to vector<24x128xf32>
    %33 = arith.addf %29, %32 : vector<24x128xf32>
    %34 = arith.mulf %33, %33 : vector<24x128xf32>
    %cst_18 = arith.constant dense<0.000000e+00> : vector<24xf32>
    %35 = vector.multi_reduction <add>, %34, %cst_18 [1] : vector<24x128xf32> to vector<24xf32>
    %36 = vector.shape_cast %35 : vector<24xf32> to vector<24x1xf32>
    %cst_19 = arith.constant 1.000000e-24 : f32
    %37 = vector.broadcast %cst_19 : f32 to vector<24x1xf32>
    %38 = arith.maximumf %36, %37 : vector<24x1xf32>
    %39 = math.rsqrt %38 : vector<24x1xf32>
    %40 = vector.broadcast %39 : vector<24x1xf32> to vector<24x128xf32>
    %41 = arith.mulf %33, %40 : vector<24x128xf32>
    %42 = vector.extract_strided_slice %41 {offsets = [0, 0], sizes = [8, 128], strides = [1, 1]} : vector<24x128xf32> to vector<8x128xf32>
    %c0_20 = arith.constant 0 : index
    %c0_21 = arith.constant 0 : index
    %c0_22 = arith.constant 0 : index
    %43 = vector.load %arg9[%c0_20, %c0_21, %c0_22] : memref<2x8x128xf32, #tpu.memory_space<vmem>>, vector<1x8x128xf32>
    %44 = vector.shape_cast %43 : vector<1x8x128xf32> to vector<8x128xf32>
    %45 = vector.shape_cast %42 : vector<8x128xf32> to vector<1x8x128xf32>
    tpu.vector_store %arg9[%c0_20, %c0_21, %c0_22], %45 {strides = array<i32>} : memref<2x8x128xf32, #tpu.memory_space<vmem>>, vector<1x8x128xf32>,
    %46 = vector.extract_strided_slice %41 {offsets = [8, 0], sizes = [8, 128], strides = [1, 1]} : vector<24x128xf32> to vector<8x128xf32>
    %c1_23 = arith.constant 1 : index
    %c0_24 = arith.constant 0 : index
    %c0_25 = arith.constant 0 : index
    %47 = vector.load %arg9[%c1_23, %c0_24, %c0_25] : memref<2x8x128xf32, #tpu.memory_space<vmem>>, vector<1x8x128xf32>
    %48 = vector.shape_cast %47 : vector<1x8x128xf32> to vector<8x128xf32>
    %49 = vector.shape_cast %46 : vector<8x128xf32> to vector<1x8x128xf32>
    tpu.vector_store %arg9[%c1_23, %c0_24, %c0_25], %49 {strides = array<i32>} : memref<2x8x128xf32, #tpu.memory_space<vmem>>, vector<1x8x128xf32>,
    %50 = vector.extract_strided_slice %33 {offsets = [16, 0], sizes = [8, 128], strides = [1, 1]} : vector<24x128xf32> to vector<8x128xf32>
    %c0_26 = arith.constant 0 : index
    %c0_27 = arith.constant 0 : index
    %51 = vector.load %arg7[%c0_26, %c0_27] : memref<8x128xf32, #tpu.memory_space<vmem>>, vector<8x128xf32>
    tpu.vector_store %arg7[%c0_26, %c0_27], %50 {strides = array<i32>} : memref<8x128xf32, #tpu.memory_space<vmem>>, vector<8x128xf32>,
    %52 = vector.extract_strided_slice %41 {offsets = [16, 0], sizes = [8, 128], strides = [1, 1]} : vector<24x128xf32> to vector<8x128xf32>
    %c0_28 = arith.constant 0 : index
    %c0_29 = arith.constant 0 : index
    %53 = vector.load %arg8[%c0_28, %c0_29] : memref<8x128xf32, #tpu.memory_space<vmem>>, vector<8x128xf32>
    tpu.vector_store %arg8[%c0_28, %c0_29], %52 {strides = array<i32>} : memref<8x128xf32, #tpu.memory_space<vmem>>, vector<8x128xf32>,
    return
  }
  func.func @transform_0(%arg0: i32) -> (i32, i32) {
    %c0_i32 = arith.constant 0 : i32
    %c0_i32_0 = arith.constant 0 : i32
    return %arg0, %c0_i32 : i32, i32
  }
  func.func @transform_1(%arg0: i32) -> (i32, i32) {
    %c0_i32 = arith.constant 0 : i32
    %c0_i32_0 = arith.constant 0 : i32
    %c0_i32_1 = arith.constant 0 : i32
    return %c0_i32, %c0_i32_0 : i32, i32
  }
  func.func @transform_2(%arg0: i32) -> (i32, i32) {
    %c0_i32 = arith.constant 0 : i32
    %c0_i32_0 = arith.constant 0 : i32
    %c0_i32_1 = arith.constant 0 : i32
    return %c0_i32, %c0_i32_0 : i32, i32
  }
  func.func @transform_3(%arg0: i32) -> (i32, i32) {
    %c0_i32 = arith.constant 0 : i32
    %c0_i32_0 = arith.constant 0 : i32
    %c0_i32_1 = arith.constant 0 : i32
    return %c0_i32, %c0_i32_0 : i32, i32
  }
  func.func @transform_4(%arg0: i32) -> (i32, i32) {
    %c0_i32 = arith.constant 0 : i32
    %c0_i32_0 = arith.constant 0 : i32
    %c0_i32_1 = arith.constant 0 : i32
    return %c0_i32, %c0_i32_0 : i32, i32
  }
  func.func @transform_5(%arg0: i32) -> (i32, i32) {
    %c0_i32 = arith.constant 0 : i32
    %c0_i32_0 = arith.constant 0 : i32
    %c0_i32_1 = arith.constant 0 : i32
    return %c0_i32, %c0_i32_0 : i32, i32
  }
  func.func @transform_6(%arg0: i32) -> (i32, i32) {
    %c0_i32 = arith.constant 0 : i32
    %c0_i32_0 = arith.constant 0 : i32
    return %arg0, %c0_i32 : i32, i32
  }
  func.func @transform_7(%arg0: i32) -> (i32, i32) {
    %c0_i32 = arith.constant 0 : i32
    %c0_i32_0 = arith.constant 0 : i32
    return %arg0, %c0_i32 : i32, i32
  }
  func.func @transform_8(%arg0: i32) -> (i32, i32, i32) {
    %c0_i32 = arith.constant 0 : i32
    %c0_i32_0 = arith.constant 0 : i32
    %c0_i32_1 = arith.constant 0 : i32
    return %c0_i32, %arg0, %c0_i32_0 : i32, i32, i32
  }
}

</mosaic_0001>

<llo_original>
// kernel: tpu_custom_call.1
$region0: #{tpu_custom_call.1}
  #allocation0 [shape = 'u32[]', space=smem, size = 0x4, offset = 0x4, fixed_abs, tag = 'smem constant byte address 0x4 - core index']
  #allocation1 [shape = 'u32[144,128]{1,0:T(1,128)}', space=vmem, size = 0x12000, scoped, tag = 'internal scratch']
  %s0 = inlined_call_operand.hbm [shape: f32[8,256], index: 0, kind: input, shape index: {}]
  %s1 = inlined_call_operand.hbm [shape: f32[256,384], index: 1, kind: input, shape index: {}]
  %s2 = inlined_call_operand.hbm [shape: f32[128,128], index: 2, kind: input, shape index: {}]
  %s3 = inlined_call_operand.vmem [shape: f32[3,128], index: 3, kind: input, shape index: {}]
  %s4 = inlined_call_operand.hbm [shape: f32[128,128], index: 4, kind: input, shape index: {}]
  %s5 = inlined_call_operand.vmem [shape: f32[1,128], index: 5, kind: input, shape index: {}]
  %s6 = inlined_call_operand.hbm [shape: f32[8,128], index: 6, kind: output, shape index: {0}]
  %s7 = inlined_call_operand.hbm [shape: f32[8,128], index: 7, kind: output, shape index: {1}]
  %s8 = inlined_call_operand.hbm [shape: f32[2,8,128], index: 8, kind: output, shape index: {2}]
  %9 = xla_tuple %s6, %s7, %s8
  %s10 = sld [smem:[#allocation0]]
  $region66: #{tpu_custom_call.1} parent=0
    _
  %s12 = ssub.s32 1, %s10
  %s13 = scalar_select 0, %s12, %s10
  $region1: #{tpu_custom_call.1} parent=0
    #allocation2 [shape = 'u8[8192]{0}', space=vmem, size = 0x2000, scoped, tag = 'input window, operand 0, single buffered']
    #allocation3 [shape = 's32[1]{0}', space=sflag, size = 0x4, scoped, tag = 'scoped memory for tpu_custom_call.1']
    #allocation4 [shape = 's32[1]{0}', space=sflag, size = 0x4, scoped, tag = 'scoped memory for tpu_custom_call.1']
    #allocation5 [shape = 'u8[393216]{0}', space=vmem, size = 0x60000, scoped, tag = 'input window, operand 1, single buffered']
    #allocation6 [shape = 's32[1]{0}', space=sflag, size = 0x4, scoped, tag = 'scoped memory for tpu_custom_call.1']
    #allocation7 [shape = 'u8[65536]{0}', space=vmem, size = 0x10000, scoped, tag = 'input window, operand 2, single buffered']
    #allocation8 [shape = 'u8[65536]{0}', space=vmem, size = 0x10000, scoped, tag = 'input window, operand 4, single buffered']
    #allocation9 [shape = 's32[1]{0}', space=sflag, size = 0x4, scoped, tag = 'scoped memory for tpu_custom_call.1']
    #allocation10 [shape = 'u8[4096]{0}', space=vmem, size = 0x1000, scoped, tag = 'output window, operand 0, single buffered']
    #allocation11 [shape = 'u8[4096]{0}', space=vmem, size = 0x1000, scoped, tag = 'output window, operand 1, single buffered']
    #allocation12 [shape = 's32[1]{0}', space=sflag, size = 0x4, scoped, tag = 'scoped memory for tpu_custom_call.1']
    #allocation13 [shape = 'u8[8192]{0}', space=vmem, size = 0x2000, scoped, tag = 'output window, operand 2, single buffered']
    %14 = vsyncpa [#allocation3], 0
    %15 = vsyncpa [#allocation6], 0
    %16 = vsyncpa [#allocation9], 0
    %17 = vsyncpa [#allocation4], 0
    %18 = vsyncpa [#allocation12], 0
    // Predicated region
    $region2: #{tpu_custom_call.1} parent=1 // pred_check
      _
    $region3: #{tpu_custom_call.1} parent=1 // pred_check_branch
      %20 = sbr.rel (0) target = $region5
    $region4: #{tpu_custom_call.1} parent=1 // pred_region
      %s22 = ssub.s32 256, 256
      %23 = vsyncadd [#allocation3], %s22
      %s25 = sshll.u32 [#allocation2], 4
      %s26 = int_to_ptr.vmem [resolvable:$true] %s25
      %28 = dma.hbm_to_vmem [thread:$0]  %s0, 256, %s26, [#allocation3]
    $region5: #{tpu_custom_call.1} parent=1 // pred_fallthru
      _
    // Predicated region
    $region6: #{tpu_custom_call.1} parent=1 // pred_check
      _
    $region7: #{tpu_custom_call.1} parent=1 // pred_check_branch
      %30 = sbr.rel (0) target = $region9
    $region8: #{tpu_custom_call.1} parent=1 // pred_region
      %s32 = ssub.s32 12288, 12288
      %33 = vsyncadd [#allocation6], %s32
      %s34 = sshll.u32 [#allocation5], 4
      %s35 = int_to_ptr.vmem [resolvable:$true] %s34
      %40 = dma.hbm_to_vmem [thread:$0]  %s1, 12288, %s35, [#allocation6], 384, 384, 24
    $region9: #{tpu_custom_call.1} parent=1 // pred_fallthru
      _
    // Predicated region
    $region10: #{tpu_custom_call.1} parent=1 // pred_check
      _
    $region11: #{tpu_custom_call.1} parent=1 // pred_check_branch
      %42 = sbr.rel (0) target = $region13
    $region12: #{tpu_custom_call.1} parent=1 // pred_region
      %s44 = ssub.s32 2048, 2048
      %45 = vsyncadd [#allocation6], %s44
      %s46 = sshll.u32 [#allocation7], 4
      %s47 = int_to_ptr.vmem [resolvable:$true] %s46
      %52 = dma.hbm_to_vmem [thread:$0]  %s2, 2048, %s47, [#allocation6], 128, 128, 8
    $region13: #{tpu_custom_call.1} parent=1 // pred_fallthru
      _
    // Predicated region
    $region14: #{tpu_custom_call.1} parent=1 // pred_check
      _
    $region15: #{tpu_custom_call.1} parent=1 // pred_check_branch
      %54 = sbr.rel (0) target = $region17
    $region16: #{tpu_custom_call.1} parent=1 // pred_region
      _
    $region17: #{tpu_custom_call.1} parent=1 // pred_fallthru
      _
    // Predicated region
    $region18: #{tpu_custom_call.1} parent=1 // pred_check
      _
    $region19: #{tpu_custom_call.1} parent=1 // pred_check_branch
      %56 = sbr.rel (0) target = $region21
    $region20: #{tpu_custom_call.1} parent=1 // pred_region
      %s58 = ssub.s32 2048, 2048
      %59 = vsyncadd [#allocation9], %s58
      %s60 = sshll.u32 [#allocation8], 4
      %s61 = int_to_ptr.vmem [resolvable:$true] %s60
      %66 = dma.hbm_to_vmem [thread:$0]  %s4, 2048, %s61, [#allocation9], 128, 128, 8
    $region21: #{tpu_custom_call.1} parent=1 // pred_fallthru
      _
    // Predicated region
    $region22: #{tpu_custom_call.1} parent=1 // pred_check
      _
    $region23: #{tpu_custom_call.1} parent=1 // pred_check_branch
      %68 = sbr.rel (0) target = $region25
    $region24: #{tpu_custom_call.1} parent=1 // pred_region
      _
    $region25: #{tpu_custom_call.1} parent=1 // pred_fallthru
      _
    // Predicated region
    $region26: #{tpu_custom_call.1} parent=1 // pred_check
      _
    $region27: #{tpu_custom_call.1} parent=1 // pred_check_branch
      %70 = sbr.rel (0) target = $region29
    $region28: #{tpu_custom_call.1} parent=1 // pred_region
      %71 = dma.done [#allocation3], 256
    $region29: #{tpu_custom_call.1} parent=1 // pred_fallthru
      _
    // Predicated region
    $region30: #{tpu_custom_call.1} parent=1 // pred_check
      _
    $region31: #{tpu_custom_call.1} parent=1 // pred_check_branch
      %73 = sbr.rel (0) target = $region33
    $region32: #{tpu_custom_call.1} parent=1 // pred_region
      %74 = dma.done [#allocation6], 12288
    $region33: #{tpu_custom_call.1} parent=1 // pred_fallthru
      _
    // Predicated region
    $region34: #{tpu_custom_call.1} parent=1 // pred_check
      _
    $region35: #{tpu_custom_call.1} parent=1 // pred_check_branch
      %76 = sbr.rel (0) target = $region37
    $region36: #{tpu_custom_call.1} parent=1 // pred_region
      %77 = dma.done [#allocation6], 2048
    $region37: #{tpu_custom_call.1} parent=1 // pred_fallthru
      _
    // Predicated region
    $region38: #{tpu_custom_call.1} parent=1 // pred_check
      _
    $region39: #{tpu_custom_call.1} parent=1 // pred_check_branch
      %79 = sbr.rel (0) target = $region41
    $region40: #{tpu_custom_call.1} parent=1 // pred_region
      %80 = dma.done [#allocation9], 2048
    $region41: #{tpu_custom_call.1} parent=1 // pred_fallthru
      _
    %v81 = vld [vmem:[#allocation2] sm:$0xff]
    %v82 = vld [vmem:[#allocation2 + $0x8] sm:$0xff]
    %v83 = vld [vmem:[#allocation5] sm:$0xff]
    %v84 = vld [vmem:[#allocation5 + $0x8] sm:$0xff]
    %v85 = vld [vmem:[#allocation5 + $0x10] sm:$0xff]
    %v86 = vld [vmem:[#allocation5 + $0x18] sm:$0xff]
    %v87 = vld [vmem:[#allocation5 + $0x20] sm:$0xff]
    %v88 = vld [vmem:[#allocation5 + $0x28] sm:$0xff]
    %v89 = vld [vmem:[#allocation5 + $0x30] sm:$0xff]
    %v90 = vld [vmem:[#allocation5 + $0x38] sm:$0xff]
    %v91 = vld [vmem:[#allocation5 + $0x40] sm:$0xff]
    %v92 = vld [vmem:[#allocation5 + $0x48] sm:$0xff]
    %v93 = vld [vmem:[#allocation5 + $0x50] sm:$0xff]
    %v94 = vld [vmem:[#allocation5 + $0x58] sm:$0xff]
    %v95 = vld [vmem:[#allocation5 + $0x60] sm:$0xff]
    %v96 = vld [vmem:[#allocation5 + $0x68] sm:$0xff]
    %v97 = vld [vmem:[#allocation5 + $0x70] sm:$0xff]
    %v98 = vld [vmem:[#allocation5 + $0x78] sm:$0xff]
    %v99 = vld [vmem:[#allocation5 + $0x80] sm:$0xff]
    %v100 = vld [vmem:[#allocation5 + $0x88] sm:$0xff]
    %v101 = vld [vmem:[#allocation5 + $0x90] sm:$0xff]
    %v102 = vld [vmem:[#allocation5 + $0x98] sm:$0xff]
    %v103 = vld [vmem:[#allocation5 + $0xa0] sm:$0xff]
    %v104 = vld [vmem:[#allocation5 + $0xa8] sm:$0xff]
    %v105 = vld [vmem:[#allocation5 + $0xb0] sm:$0xff]
    %v106 = vld [vmem:[#allocation5 + $0xb8] sm:$0xff]
    %v107 = vld [vmem:[#allocation5 + $0xc0] sm:$0xff]
    %v108 = vld [vmem:[#allocation5 + $0xc8] sm:$0xff]
    %v109 = vld [vmem:[#allocation5 + $0xd0] sm:$0xff]
    %v110 = vld [vmem:[#allocation5 + $0xd8] sm:$0xff]
    %v111 = vld [vmem:[#allocation5 + $0xe0] sm:$0xff]
    %v112 = vld [vmem:[#allocation5 + $0xe8] sm:$0xff]
    %v113 = vld [vmem:[#allocation5 + $0xf0] sm:$0xff]
    %v114 = vld [vmem:[#allocation5 + $0xf8] sm:$0xff]
    %v115 = vld [vmem:[#allocation5 + $0x100] sm:$0xff]
    %v116 = vld [vmem:[#allocation5 + $0x108] sm:$0xff]
    %v117 = vld [vmem:[#allocation5 + $0x110] sm:$0xff]
    %v118 = vld [vmem:[#allocation5 + $0x118] sm:$0xff]
    %v119 = vld [vmem:[#allocation5 + $0x120] sm:$0xff]
    %v120 = vld [vmem:[#allocation5 + $0x128] sm:$0xff]
    %v121 = vld [vmem:[#allocation5 + $0x130] sm:$0xff]
    %v122 = vld [vmem:[#allocation5 + $0x138] sm:$0xff]
    %v123 = vld [vmem:[#allocation5 + $0x140] sm:$0xff]
    %v124 = vld [vmem:[#allocation5 + $0x148] sm:$0xff]
    %v125 = vld [vmem:[#allocation5 + $0x150] sm:$0xff]
    %v126 = vld [vmem:[#allocation5 + $0x158] sm:$0xff]
    %v127 = vld [vmem:[#allocation5 + $0x160] sm:$0xff]
    %v128 = vld [vmem:[#allocation5 + $0x168] sm:$0xff]
    %v129 = vld [vmem:[#allocation5 + $0x170] sm:$0xff]
    %v130 = vld [vmem:[#allocation5 + $0x178] sm:$0xff]
    %v131 = vld [vmem:[#allocation5 + $0x180] sm:$0xff]
    %v132 = vld [vmem:[#allocation5 + $0x188] sm:$0xff]
    %v133 = vld [vmem:[#allocation5 + $0x190] sm:$0xff]
    %v134 = vld [vmem:[#allocation5 + $0x198] sm:$0xff]
    %v135 = vld [vmem:[#allocation5 + $0x1a0] sm:$0xff]
    %v136 = vld [vmem:[#allocation5 + $0x1a8] sm:$0xff]
    %v137 = vld [vmem:[#allocation5 + $0x1b0] sm:$0xff]
    %v138 = vld [vmem:[#allocation5 + $0x1b8] sm:$0xff]
    %v139 = vld [vmem:[#allocation5 + $0x1c0] sm:$0xff]
    %v140 = vld [vmem:[#allocation5 + $0x1c8] sm:$0xff]
    %v141 = vld [vmem:[#allocation5 + $0x1d0] sm:$0xff]
    %v142 = vld [vmem:[#allocation5 + $0x1d8] sm:$0xff]
    %v143 = vld [vmem:[#allocation5 + $0x1e0] sm:$0xff]
    %v144 = vld [vmem:[#allocation5 + $0x1e8] sm:$0xff]
    %v145 = vld [vmem:[#allocation5 + $0x1f0] sm:$0xff]
    %v146 = vld [vmem:[#allocation5 + $0x1f8] sm:$0xff]
    %v147 = vld [vmem:[#allocation5 + $0x200] sm:$0xff]
    %v148 = vld [vmem:[#allocation5 + $0x208] sm:$0xff]
    %v149 = vld [vmem:[#allocation5 + $0x210] sm:$0xff]
    %v150 = vld [vmem:[#allocation5 + $0x218] sm:$0xff]
    %v151 = vld [vmem:[#allocation5 + $0x220] sm:$0xff]
    %v152 = vld [vmem:[#allocation5 + $0x228] sm:$0xff]
    %v153 = vld [vmem:[#allocation5 + $0x230] sm:$0xff]
    %v154 = vld [vmem:[#allocation5 + $0x238] sm:$0xff]
    %v155 = vld [vmem:[#allocation5 + $0x240] sm:$0xff]
    %v156 = vld [vmem:[#allocation5 + $0x248] sm:$0xff]
    %v157 = vld [vmem:[#allocation5 + $0x250] sm:$0xff]
    %v158 = vld [vmem:[#allocation5 + $0x258] sm:$0xff]
    %v159 = vld [vmem:[#allocation5 + $0x260] sm:$0xff]
    %v160 = vld [vmem:[#allocation5 + $0x268] sm:$0xff]
    %v161 = vld [vmem:[#allocation5 + $0x270] sm:$0xff]
    %v162 = vld [vmem:[#allocation5 + $0x278] sm:$0xff]
    %v163 = vld [vmem:[#allocation5 + $0x280] sm:$0xff]
    %v164 = vld [vmem:[#allocation5 + $0x288] sm:$0xff]
    %v165 = vld [vmem:[#allocation5 + $0x290] sm:$0xff]
    %v166 = vld [vmem:[#allocation5 + $0x298] sm:$0xff]
    %v167 = vld [vmem:[#allocation5 + $0x2a0] sm:$0xff]
    %v168 = vld [vmem:[#allocation5 + $0x2a8] sm:$0xff]
    %v169 = vld [vmem:[#allocation5 + $0x2b0] sm:$0xff]
    %v170 = vld [vmem:[#allocation5 + $0x2b8] sm:$0xff]
    %v171 = vld [vmem:[#allocation5 + $0x2c0] sm:$0xff]
    %v172 = vld [vmem:[#allocation5 + $0x2c8] sm:$0xff]
    %v173 = vld [vmem:[#allocation5 + $0x2d0] sm:$0xff]
    %v174 = vld [vmem:[#allocation5 + $0x2d8] sm:$0xff]
    %v175 = vld [vmem:[#allocation5 + $0x2e0] sm:$0xff]
    %v176 = vld [vmem:[#allocation5 + $0x2e8] sm:$0xff]
    %v177 = vld [vmem:[#allocation5 + $0x2f0] sm:$0xff]
    %v178 = vld [vmem:[#allocation5 + $0x2f8] sm:$0xff]
    %179 = vmatprep.subr.mxu0 %v84
    %180 = vmatpush1.msra.mxu0 %v83
    %181 = vmatprep.subr.mxu0 %v87
    %182 = vmatpush1.msra.mxu0 %v86
    %183 = vmatprep.subr.mxu0 %v90
    %184 = vmatpush1.msra.mxu0 %v89
    %185 = vmatprep.subr.mxu0 %v93
    %186 = vmatpush1.msra.mxu0 %v92
    %187 = vmatprep.subr.mxu0 %v96
    %188 = vmatpush1.msra.mxu0 %v95
    %189 = vmatprep.subr.mxu0 %v99
    %190 = vmatpush1.msra.mxu0 %v98
    %191 = vmatprep.subr.mxu0 %v102
    %192 = vmatpush1.msra.mxu0 %v101
    %193 = vmatprep.subr.mxu0 %v105
    %194 = vmatpush1.msra.mxu0 %v104
    %195 = vmatprep.subr.mxu0 %v108
    %196 = vmatpush1.msra.mxu0 %v107
    %197 = vmatprep.subr.mxu0 %v111
    %198 = vmatpush1.msra.mxu0 %v110
    %199 = vmatprep.subr.mxu0 %v114
    %200 = vmatpush1.msra.mxu0 %v113
    %201 = vmatprep.subr.mxu0 %v117
    %202 = vmatpush1.msra.mxu0 %v116
    %203 = vmatprep.subr.mxu0 %v120
    %204 = vmatpush1.msra.mxu0 %v119
    %205 = vmatprep.subr.mxu0 %v123
    %206 = vmatpush1.msra.mxu0 %v122
    %207 = vmatprep.subr.mxu0 %v126
    %208 = vmatpush1.msra.mxu0 %v125
    %209 = vmatprep.subr.mxu0 %v129
    %210 = vmatpush1.msra.mxu0 %v128
    %211 = vmatprep.subr.mxu0 %v132
    %212 = vmatpush1.msra.mxu0 %v131
    %213 = vmatprep.subr.mxu0 %v135
    %214 = vmatpush1.msra.mxu0 %v134
    %215 = vmatprep.subr.mxu0 %v138
    %216 = vmatpush1.msra.mxu0 %v137
    %217 = vmatprep.subr.mxu0 %v141
    %218 = vmatpush1.msra.mxu0 %v140
    %219 = vmatprep.subr.mxu0 %v144
    %220 = vmatpush1.msra.mxu0 %v143
    %221 = vmatprep.subr.mxu0 %v147
    %222 = vmatpush1.msra.mxu0 %v146
    %223 = vmatprep.subr.mxu0 %v150
    %224 = vmatpush1.msra.mxu0 %v149
    %225 = vmatprep.subr.mxu0 %v153
    %226 = vmatpush1.msra.mxu0 %v152
    %227 = vmatprep.subr.mxu0 %v156
    %228 = vmatpush1.msra.mxu0 %v155
    %229 = vmatprep.subr.mxu0 %v159
    %230 = vmatpush1.msra.mxu0 %v158
    %231 = vmatprep.subr.mxu0 %v162
    %232 = vmatpush1.msra.mxu0 %v161
    %233 = vmatprep.subr.mxu0 %v165
    %234 = vmatpush1.msra.mxu0 %v164
    %235 = vmatprep.subr.mxu0 %v168
    %236 = vmatpush1.msra.mxu0 %v167
    %237 = vmatprep.subr.mxu0 %v171
    %238 = vmatpush1.msra.mxu0 %v170
    %239 = vmatprep.subr.mxu0 %v174
    %240 = vmatpush1.msra.mxu0 %v173
    %241 = vmatprep.subr.mxu0 %v177
    %242 = vmatpush1.msra.mxu0 %v176
    %243 = vmatprep.mubr.f32.mxu0 %v82
    %244 = vmatmul.mubr.f32.gmra.mrb[0].mxu0 %v81
    %v245 = vpop.f32.mrb[0].mxu0
    %v246 = vadd.f32 0.0, %v245
    %v247 = vpop.f32.mrb[0].mxu0
    %v248 = vadd.f32 0.0, %v247
    %249 = vdwg.mxu0
    %250 = vmatprep.subr.mxu0 0.0
    %251 = vmatpush1.msra.mxu0 %v85
    %252 = vmatprep.subr.mxu0 0.0
    %253 = vmatpush1.msra.mxu0 %v88
    %254 = vmatprep.subr.mxu0 0.0
    %255 = vmatpush1.msra.mxu0 %v91
    %256 = vmatprep.subr.mxu0 0.0
    %257 = vmatpush1.msra.mxu0 %v94
    %258 = vmatprep.subr.mxu0 0.0
    %259 = vmatpush1.msra.mxu0 %v97
    %260 = vmatprep.subr.mxu0 0.0
    %261 = vmatpush1.msra.mxu0 %v100
    %262 = vmatprep.subr.mxu0 0.0
    %263 = vmatpush1.msra.mxu0 %v103
    %264 = vmatprep.subr.mxu0 0.0
    %265 = vmatpush1.msra.mxu0 %v106
    %266 = vmatprep.subr.mxu0 0.0
    %267 = vmatpush1.msra.mxu0 %v109
    %268 = vmatprep.subr.mxu0 0.0
    %269 = vmatpush1.msra.mxu0 %v112
    %270 = vmatprep.subr.mxu0 0.0
    %271 = vmatpush1.msra.mxu0 %v115
    %272 = vmatprep.subr.mxu0 0.0
    %273 = vmatpush1.msra.mxu0 %v118
    %274 = vmatprep.subr.mxu0 0.0
    %275 = vmatpush1.msra.mxu0 %v121
    %276 = vmatprep.subr.mxu0 0.0
    %277 = vmatpush1.msra.mxu0 %v124
    %278 = vmatprep.subr.mxu0 0.0
    %279 = vmatpush1.msra.mxu0 %v127
    %280 = vmatprep.subr.mxu0 0.0
    %281 = vmatpush1.msra.mxu0 %v130
    %282 = vmatprep.subr.mxu0 0.0
    %283 = vmatpush1.msra.mxu0 %v133
    %284 = vmatprep.subr.mxu0 0.0
    %285 = vmatpush1.msra.mxu0 %v136
    %286 = vmatprep.subr.mxu0 0.0
    %287 = vmatpush1.msra.mxu0 %v139
    %288 = vmatprep.subr.mxu0 0.0
    %289 = vmatpush1.msra.mxu0 %v142
    %290 = vmatprep.subr.mxu0 0.0
    %291 = vmatpush1.msra.mxu0 %v145
    %292 = vmatprep.subr.mxu0 0.0
    %293 = vmatpush1.msra.mxu0 %v148
    %294 = vmatprep.subr.mxu0 0.0
    %295 = vmatpush1.msra.mxu0 %v151
    %296 = vmatprep.subr.mxu0 0.0
    %297 = vmatpush1.msra.mxu0 %v154
    %298 = vmatprep.subr.mxu0 0.0
    %299 = vmatpush1.msra.mxu0 %v157
    %300 = vmatprep.subr.mxu0 0.0
    %301 = vmatpush1.msra.mxu0 %v160
    %302 = vmatprep.subr.mxu0 0.0
    %303 = vmatpush1.msra.mxu0 %v163
    %304 = vmatprep.subr.mxu0 0.0
    %305 = vmatpush1.msra.mxu0 %v166
    %306 = vmatprep.subr.mxu0 0.0
    %307 = vmatpush1.msra.mxu0 %v169
    %308 = vmatprep.subr.mxu0 0.0
    %309 = vmatpush1.msra.mxu0 %v172
    %310 = vmatprep.subr.mxu0 0.0
    %311 = vmatpush1.msra.mxu0 %v175
    %312 = vmatprep.subr.mxu0 0.0
    %313 = vmatpush1.msra.mxu0 %v178
    %314 = vmatprep.mubr.f32.mxu0 %v82
    %315 = vmatmul.mubr.f32.gmra.mrb[0].mxu0 %v81
    %v316 = vpop.f32.mrb[0].mxu0
    %v317 = vadd.f32 0.0, %v316
    %v318 = vpop.f32.mrb[0].mxu0
    %319 = vdwg.mxu0
    %v320 = vld [vmem:[%s3] sm:$0x1]
    %v321 = vlaneseq
    %v322 = vshrl.u32 %v321, 7
    %v323 = vsub.s32 0, %v322
    %v324 = vrot.slane %v320, %v323
    %v325 = vld [vmem:[%s3 + $0x1] sm:$0x1]
    %v326 = vlaneseq
    %v327 = vshrl.u32 %v326, 7
    %v328 = vsub.s32 0, %v327
    %v329 = vrot.slane %v325, %v328
    %v330 = vld [vmem:[%s3 + $0x2] sm:$0x1]
    %v331 = vlaneseq
    %v332 = vshrl.u32 %v331, 7
    %v333 = vsub.s32 0, %v332
    %v334 = vrot.slane %v330, %v333
    %v335 = vld [vmem:[#allocation7] sm:$0xff]
    %v336 = vld [vmem:[#allocation7 + $0x8] sm:$0xff]
    %v337 = vld [vmem:[#allocation7 + $0x10] sm:$0xff]
    %v338 = vld [vmem:[#allocation7 + $0x18] sm:$0xff]
    %v339 = vld [vmem:[#allocation7 + $0x20] sm:$0xff]
    %v340 = vld [vmem:[#allocation7 + $0x28] sm:$0xff]
    %v341 = vld [vmem:[#allocation7 + $0x30] sm:$0xff]
    %v342 = vld [vmem:[#allocation7 + $0x38] sm:$0xff]
    %v343 = vld [vmem:[#allocation7 + $0x40] sm:$0xff]
    %v344 = vld [vmem:[#allocation7 + $0x48] sm:$0xff]
    %v345 = vld [vmem:[#allocation7 + $0x50] sm:$0xff]
    %v346 = vld [vmem:[#allocation7 + $0x58] sm:$0xff]
    %v347 = vld [vmem:[#allocation7 + $0x60] sm:$0xff]
    %v348 = vld [vmem:[#allocation7 + $0x68] sm:$0xff]
    %v349 = vld [vmem:[#allocation7 + $0x70] sm:$0xff]
    %v350 = vld [vmem:[#allocation7 + $0x78] sm:$0xff]
    %351 = vmatprep.subr.mxu0 0.0
    %352 = vmatpush1.msra.mxu0 %v335
    %353 = vmatprep.subr.mxu0 0.0
    %354 = vmatpush1.msra.mxu0 %v336
    %355 = vmatprep.subr.mxu0 0.0
    %356 = vmatpush1.msra.mxu0 %v337
    %357 = vmatprep.subr.mxu0 0.0
    %358 = vmatpush1.msra.mxu0 %v338
    %359 = vmatprep.subr.mxu0 0.0
    %360 = vmatpush1.msra.mxu0 %v339
    %361 = vmatprep.subr.mxu0 0.0
    %362 = vmatpush1.msra.mxu0 %v340
    %363 = vmatprep.subr.mxu0 0.0
    %364 = vmatpush1.msra.mxu0 %v341
    %365 = vmatprep.subr.mxu0 0.0
    %366 = vmatpush1.msra.mxu0 %v342
    %367 = vmatprep.subr.mxu0 0.0
    %368 = vmatpush1.msra.mxu0 %v343
    %369 = vmatprep.subr.mxu0 0.0
    %370 = vmatpush1.msra.mxu0 %v344
    %371 = vmatprep.subr.mxu0 0.0
    %372 = vmatpush1.msra.mxu0 %v345
    %373 = vmatprep.subr.mxu0 0.0
    %374 = vmatpush1.msra.mxu0 %v346
    %375 = vmatprep.subr.mxu0 0.0
    %376 = vmatpush1.msra.mxu0 %v347
    %377 = vmatprep.subr.mxu0 0.0
    %378 = vmatpush1.msra.mxu0 %v348
    %379 = vmatprep.subr.mxu0 0.0
    %380 = vmatpush1.msra.mxu0 %v349
    %381 = vmatprep.subr.mxu0 0.0
    %382 = vmatpush1.msra.mxu0 %v350
    %383 = vmatprep.subr.mxu0 0.0
    %384 = vmatpush1.msra.mxu0 0.0
    %385 = vmatprep.subr.mxu0 0.0
    %386 = vmatpush1.msra.mxu0 0.0
    %387 = vmatprep.subr.mxu0 0.0
    %388 = vmatpush1.msra.mxu0 0.0
    %389 = vmatprep.subr.mxu0 0.0
    %390 = vmatpush1.msra.mxu0 0.0
    %391 = vmatprep.subr.mxu0 0.0
    %392 = vmatpush1.msra.mxu0 0.0
    %393 = vmatprep.subr.mxu0 0.0
    %394 = vmatpush1.msra.mxu0 0.0
    %395 = vmatprep.subr.mxu0 0.0
    %396 = vmatpush1.msra.mxu0 0.0
    %397 = vmatprep.subr.mxu0 0.0
    %398 = vmatpush1.msra.mxu0 0.0
    %399 = vmatprep.subr.mxu0 0.0
    %400 = vmatpush1.msra.mxu0 0.0
    %401 = vmatprep.subr.mxu0 0.0
    %402 = vmatpush1.msra.mxu0 0.0
    %403 = vmatprep.subr.mxu0 0.0
    %404 = vmatpush1.msra.mxu0 0.0
    %405 = vmatprep.subr.mxu0 0.0
    %406 = vmatpush1.msra.mxu0 0.0
    %407 = vmatprep.subr.mxu0 0.0
    %408 = vmatpush1.msra.mxu0 0.0
    %409 = vmatprep.subr.mxu0 0.0
    %410 = vmatpush1.msra.mxu0 0.0
    %411 = vmatprep.subr.mxu0 0.0
    %412 = vmatpush1.msra.mxu0 0.0
    %413 = vmatprep.subr.mxu0 0.0
    %414 = vmatpush1.msra.mxu0 0.0
    %415 = vmatprep.mubr.f32.mxu0 0.0
    %416 = vmatmul.mubr.f32.gmra.mrb[0].mxu0 %v246
    %v417 = vpop.f32.mrb[0].mxu0
    %v418 = vadd.f32 %v324, %v417
    %v419 = vpop.f32.mrb[0].mxu0
    %420 = vmatprep.mubr.f32.mxu0 0.0
    %421 = vmatmul.mubr.f32.gmra.mrb[0].mxu0 %v248
    %v422 = vpop.f32.mrb[0].mxu0
    %v423 = vadd.f32 %v329, %v422
    %v424 = vpop.f32.mrb[0].mxu0
    %425 = vmatprep.mubr.f32.mxu0 0.0
    %426 = vmatmul.mubr.f32.gmra.mrb[0].mxu0 %v317
    %v427 = vpop.f32.mrb[0].mxu0
    %v428 = vadd.f32 %v334, %v427
    %v429 = vpop.f32.mrb[0].mxu0
    %430 = vdwg.mxu0
    %v431 = vsub.f32 0.0, %v418
    %v432 = vsub.f32 0.0, %v423
    %v433 = vsub.f32 0.0, %v428
    %v434 = vmul.f32 %v431, 1.442695
    %v435 = vpow.pop %v434
    %v436 = vmul.f32 %v432, 1.442695
    %v437 = vpow.pop %v436
    %v438 = vmul.f32 %v433, 1.442695
    %v439 = vpow.pop %v438
    %v440 = vadd.f32 %v435, 1.0
    %v441 = vadd.f32 %v437, 1.0
    %v442 = vadd.f32 %v439, 1.0
    %v443 = vrcp.pop %v440
    %v444 = vmul.f32 1.0, %v443
    %v445 = vrcp.pop %v441
    %v446 = vmul.f32 1.0, %v445
    %v447 = vrcp.pop %v442
    %v448 = vmul.f32 1.0, %v447
    %v449 = vmul.f32 %v418, %v444
    %v450 = vmul.f32 %v423, %v446
    %v451 = vmul.f32 %v428, %v448
    %v452 = vld [vmem:[#allocation8] sm:$0xff]
    %v453 = vld [vmem:[#allocation8 + $0x8] sm:$0xff]
    %v454 = vld [vmem:[#allocation8 + $0x10] sm:$0xff]
    %v455 = vld [vmem:[#allocation8 + $0x18] sm:$0xff]
    %v456 = vld [vmem:[#allocation8 + $0x20] sm:$0xff]
    %v457 = vld [vmem:[#allocation8 + $0x28] sm:$0xff]
    %v458 = vld [vmem:[#allocation8 + $0x30] sm:$0xff]
    %v459 = vld [vmem:[#allocation8 + $0x38] sm:$0xff]
    %v460 = vld [vmem:[#allocation8 + $0x40] sm:$0xff]
    %v461 = vld [vmem:[#allocation8 + $0x48] sm:$0xff]
    %v462 = vld [vmem:[#allocation8 + $0x50] sm:$0xff]
    %v463 = vld [vmem:[#allocation8 + $0x58] sm:$0xff]
    %v464 = vld [vmem:[#allocation8 + $0x60] sm:$0xff]
    %v465 = vld [vmem:[#allocation8 + $0x68] sm:$0xff]
    %v466 = vld [vmem:[#allocation8 + $0x70] sm:$0xff]
    %v467 = vld [vmem:[#allocation8 + $0x78] sm:$0xff]
    %v468 = vld [vmem:[%s5] sm:$0x1]
    %v470 = vlaneseq
    %v471 = vshrl.u32 %v470, 7
    %v472 = vsub.s32 0, %v471
    %v473 = vrot.slane %v468, %v472
    %475 = vmatprep.subr.mxu0 0.0
    %476 = vmatpush1.msra.mxu0 %v452
    %477 = vmatprep.subr.mxu0 0.0
    %478 = vmatpush1.msra.mxu0 %v453
    %479 = vmatprep.subr.mxu0 0.0
    %480 = vmatpush1.msra.mxu0 %v454
    %481 = vmatprep.subr.mxu0 0.0
    %482 = vmatpush1.msra.mxu0 %v455
    %483 = vmatprep.subr.mxu0 0.0
    %484 = vmatpush1.msra.mxu0 %v456
    %485 = vmatprep.subr.mxu0 0.0
    %486 = vmatpush1.msra.mxu0 %v457
    %487 = vmatprep.subr.mxu0 0.0
    %488 = vmatpush1.msra.mxu0 %v458
    %489 = vmatprep.subr.mxu0 0.0
    %490 = vmatpush1.msra.mxu0 %v459
    %491 = vmatprep.subr.mxu0 0.0
    %492 = vmatpush1.msra.mxu0 %v460
    %493 = vmatprep.subr.mxu0 0.0
    %494 = vmatpush1.msra.mxu0 %v461
    %495 = vmatprep.subr.mxu0 0.0
    %496 = vmatpush1.msra.mxu0 %v462
    %497 = vmatprep.subr.mxu0 0.0
    %498 = vmatpush1.msra.mxu0 %v463
    %499 = vmatprep.subr.mxu0 0.0
    %500 = vmatpush1.msra.mxu0 %v464
    %501 = vmatprep.subr.mxu0 0.0
    %502 = vmatpush1.msra.mxu0 %v465
    %503 = vmatprep.subr.mxu0 0.0
    %504 = vmatpush1.msra.mxu0 %v466
    %505 = vmatprep.subr.mxu0 0.0
    %506 = vmatpush1.msra.mxu0 %v467
    %507 = vmatprep.subr.mxu0 0.0
    %508 = vmatpush1.msra.mxu0 0.0
    %509 = vmatprep.subr.mxu0 0.0
    %510 = vmatpush1.msra.mxu0 0.0
    %511 = vmatprep.subr.mxu0 0.0
    %512 = vmatpush1.msra.mxu0 0.0
    %513 = vmatprep.subr.mxu0 0.0
    %514 = vmatpush1.msra.mxu0 0.0
    %515 = vmatprep.subr.mxu0 0.0
    %516 = vmatpush1.msra.mxu0 0.0
    %517 = vmatprep.subr.mxu0 0.0
    %518 = vmatpush1.msra.mxu0 0.0
    %519 = vmatprep.subr.mxu0 0.0
    %520 = vmatpush1.msra.mxu0 0.0
    %521 = vmatprep.subr.mxu0 0.0
    %522 = vmatpush1.msra.mxu0 0.0
    %523 = vmatprep.subr.mxu0 0.0
    %524 = vmatpush1.msra.mxu0 0.0
    %525 = vmatprep.subr.mxu0 0.0
    %526 = vmatpush1.msra.mxu0 0.0
    %527 = vmatprep.subr.mxu0 0.0
    %528 = vmatpush1.msra.mxu0 0.0
    %529 = vmatprep.subr.mxu0 0.0
    %530 = vmatpush1.msra.mxu0 0.0
    %531 = vmatprep.subr.mxu0 0.0
    %532 = vmatpush1.msra.mxu0 0.0
    %533 = vmatprep.subr.mxu0 0.0
    %534 = vmatpush1.msra.mxu0 0.0
    %535 = vmatprep.subr.mxu0 0.0
    %536 = vmatpush1.msra.mxu0 0.0
    %537 = vmatprep.subr.mxu0 0.0
    %538 = vmatpush1.msra.mxu0 0.0
    %539 = vmatprep.mubr.f32.mxu0 0.0
    %540 = vmatmul.mubr.f32.gmra.mrb[0].mxu0 %v449
    %v541 = vpop.f32.mrb[0].mxu0
    %v542 = vadd.f32 %v473, %v541
    %v543 = vpop.f32.mrb[0].mxu0
    %544 = vmatprep.mubr.f32.mxu0 0.0
    %545 = vmatmul.mubr.f32.gmra.mrb[0].mxu0 %v450
    %v546 = vpop.f32.mrb[0].mxu0
    %v547 = vadd.f32 %v473, %v546
    %v548 = vpop.f32.mrb[0].mxu0
    %549 = vmatprep.mubr.f32.mxu0 0.0
    %550 = vmatmul.mubr.f32.gmra.mrb[0].mxu0 %v451
    %v551 = vpop.f32.mrb[0].mxu0
    %v552 = vadd.f32 %v473, %v551
    %v553 = vpop.f32.mrb[0].mxu0
    %554 = vdwg.mxu0
    %v555 = vmul.f32 %v542, %v542
    %v556 = vmul.f32 %v547, %v547
    %v557 = vmul.f32 %v552, %v552
    %558 = vadd.xlane.f32.xlu0 %v555
    %v559 = vpop.xlane.xlu0 %558
    %560 = vadd.xlane.f32.xlu0 %v556
    %v561 = vpop.xlane.xlu0 %560
    %562 = vadd.xlane.f32.xlu0 %v557
    %v563 = vpop.xlane.xlu0 %562
    %v564 = vmax.f32 %v559, 1e-24
    %v565 = vmax.f32 %v561, 1e-24
    %v566 = vmax.f32 %v563, 1e-24
    %v567 = vrsqrt.pop %v564
    %v568 = vrsqrt.pop %v565
    %v569 = vrsqrt.pop %v566
    %v570 = vmul.f32 %v542, %v567
    %v571 = vmul.f32 %v547, %v568
    %v572 = vmul.f32 %v552, %v569
    %573 = vst [vmem:[#allocation13] sm:$0xff] %v570
    %s574 = scalar_lea.vmem [#allocation13], 8
    %575 = vst [vmem:[%s574] sm:$0xff] %v571
    %576 = vst [vmem:[#allocation10] sm:$0xff] %v552
    %577 = vst [vmem:[#allocation11] sm:$0xff] %v572
    // Predicated region
    $region42: #{tpu_custom_call.1} parent=1 // pred_check
      _
    $region43: #{tpu_custom_call.1} parent=1 // pred_check_branch
      %579 = sbr.rel (0) target = $region45
    $region44: #{tpu_custom_call.1} parent=1 // pred_region
      %s581 = ssub.s32 128, 128
      %582 = vsyncadd [#allocation4], %s581
      %s584 = sshll.u32 [#allocation10], 4
      %s585 = int_to_ptr.vmem [resolvable:$true] %s584
      %587 = dma.vmem_to_hbm [thread:$0]  %s585, 128, %s6, [#allocation4]
    $region45: #{tpu_custom_call.1} parent=1 // pred_fallthru
      _
    // Predicated region
    $region46: #{tpu_custom_call.1} parent=1 // pred_check
      _
    $region47: #{tpu_custom_call.1} parent=1 // pred_check_branch
      %589 = sbr.rel (0) target = $region49
    $region48: #{tpu_custom_call.1} parent=1 // pred_region
      %s591 = ssub.s32 128, 128
      %592 = vsyncadd [#allocation12], %s591
      %s594 = sshll.u32 [#allocation11], 4
      %s595 = int_to_ptr.vmem [resolvable:$true] %s594
      %597 = dma.vmem_to_hbm [thread:$0]  %s595, 128, %s7, [#allocation12]
    $region49: #{tpu_custom_call.1} parent=1 // pred_fallthru
      _
    // Predicated region
    $region50: #{tpu_custom_call.1} parent=1 // pred_check
      _
    $region51: #{tpu_custom_call.1} parent=1 // pred_check_branch
      %599 = sbr.rel (0) target = $region53
    $region52: #{tpu_custom_call.1} parent=1 // pred_region
      %s601 = ssub.s32 256, 256
      %602 = vsyncadd [#allocation12], %s601
      %s603 = sshll.u32 [#allocation13], 4
      %s604 = int_to_ptr.vmem [resolvable:$true] %s603
      %609 = dma.vmem_to_hbm [thread:$0]  %s604, 256, %s8, [#allocation12], 128, 128, 8
    $region53: #{tpu_custom_call.1} parent=1 // pred_fallthru
      _
    // Predicated region
    $region54: #{tpu_custom_call.1} parent=1 // pred_check
      _
    $region55: #{tpu_custom_call.1} parent=1 // pred_check_branch
      %611 = sbr.rel (0) target = $region57
    $region56: #{tpu_custom_call.1} parent=1 // pred_region
      %612 = dma.done [#allocation4], 128
    $region57: #{tpu_custom_call.1} parent=1 // pred_fallthru
      _
    // Predicated region
    $region58: #{tpu_custom_call.1} parent=1 // pred_check
      _
    $region59: #{tpu_custom_call.1} parent=1 // pred_check_branch
      %614 = sbr.rel (0) target = $region61
    $region60: #{tpu_custom_call.1} parent=1 // pred_region
      %615 = dma.done [#allocation12], 128
    $region61: #{tpu_custom_call.1} parent=1 // pred_fallthru
      _
    // Predicated region
    $region62: #{tpu_custom_call.1} parent=1 // pred_check
      _
    $region63: #{tpu_custom_call.1} parent=1 // pred_check_branch
      %617 = sbr.rel (0) target = $region65
    $region64: #{tpu_custom_call.1} parent=1 // pred_region
      %618 = dma.done [#allocation12], 256
    $region65: #{tpu_custom_call.1} parent=1 // pred_fallthru
      _
    %619 = vsyncpa [#allocation3], 1
    %620 = vsyncpa [#allocation6], 1
    %621 = vsyncpa [#allocation9], 1
    %622 = vsyncpa [#allocation4], 1
    %623 = vsyncpa [#allocation12], 1

</llo_original>
